<compile_context>
chip_gen: v6e
topology: v6e:2x2x1
jax: 0.10.0
libtpu: 0.0.40
codegen_flags: <defaults>
</compile_context>

<pallas_src>
import functools

import jax
import jax.numpy as jnp
from jax.experimental import pallas as pl
from jax.experimental.pallas import tpu as pltpu


def _e2tts_kernel(
    # scalar-prefetch ref (SMEM)
    drop_ref,
    # tensor inputs (VMEM tiles)
    x1_ref, x0_ref, t_ref, seq_ref, start_ref, end_ref, w_ref, bias_ref,
    # outputs
    cond_ref, pred_ref, loss_ref, cnt_ref,
    *, d_true,
):
    x1 = x1_ref[...]                      # (TM, Dp) f32
    x0 = x0_ref[...]                      # (TM, Dp) f32
    t = t_ref[...]                        # (TM, 1)  f32  (per-row time)

    # flow-matching interpolation
    phi = (1.0 - t) * x0 + t * x1
    flow = x1 - x0

    # rand span mask per row:  start <= seq < end
    seq = seq_ref[...]                    # (TM, 1) i32
    span = (seq >= start_ref[...]) & (seq < end_ref[...])        # (TM, 1) bool

    # cond = where(mask, 0, x1)
    cond = jnp.where(span, jnp.zeros_like(x1), x1)
    cond_ref[...] = cond.astype(cond_ref.dtype)

    # drop_audio_cond: zero the audio conditioning fed to the backbone
    keep = (1 - drop_ref[0]).astype(x1.dtype)
    cond_in = cond * keep

    # backbone stand-in (see TODO above): single fused MXU matmul
    #   concat([phi, cond_in], -1) @ [Wp; Wc]  -> (TM, Dp)
    xcat = jnp.concatenate([phi, cond_in], axis=-1)              # (TM, 2*Dp)
    pre = jnp.dot(xcat, w_ref[...], preferred_element_type=jnp.float32)
    pred = jnp.tanh(pre + bias_ref[...] + t)
    pred_ref[...] = pred.astype(pred_ref.dtype)

    # masked MSE partial sums for this tile (mask padded columns >= d_true)
    col = jax.lax.broadcasted_iota(jnp.int32, pred.shape, 1)     # (TM, Dp)
    valid = span & (col < d_true)
    err = (pred - flow) * (pred - flow)
    loss_val = jnp.sum(jnp.where(valid, err, jnp.zeros_like(err)))
    cnt_val = jnp.sum(span.astype(jnp.float32)) * float(d_true)

    # one lane-dense write per grid step; wrapper reads [0, 0] of each tile
    loss_ref[...] = jnp.broadcast_to(loss_val, loss_ref.shape)
    cnt_ref[...] = jnp.broadcast_to(cnt_val, cnt_ref.shape)


def e2tts_forward(text, feats, feats_lengths, params, key,
                  frac_lengths_mask=(0.7, 1.0),
                  audio_drop_prob=0.3, cond_drop_prob=0.2,
                  tile_m=512):
    """Pallas implementation of E2TTS.forward -> (loss, cond, pred)."""
    B, N, D = feats.shape
    wp, wc, bias = params

    k_frac, k_rand, k_time, k_noise, k_drop = jax.random.split(key, 5)

    # mask_from_frac_lengths scalar bookkeeping (mask itself built in-kernel)
    frac = jax.random.uniform(
        k_frac, (B,), minval=frac_lengths_mask[0], maxval=frac_lengths_mask[1])
    lengths = (frac * feats_lengths.astype(jnp.float32)).astype(jnp.int32)
    max_start = feats_lengths.astype(jnp.int32) - lengths
    rand = jax.random.uniform(k_rand, (B,))
    start = jnp.clip((max_start.astype(jnp.float32) * rand).astype(jnp.int32), 0)
    end = start + lengths

    time = jax.random.uniform(k_time, (B,), dtype=feats.dtype)
    x0 = jax.random.normal(k_noise, feats.shape, dtype=feats.dtype)

    # drop decisions (PyTorch used python random.random(); use jax.random here)
    r_audio, r_cond = jax.random.uniform(k_drop, (2,))
    drop_both = r_cond < cond_drop_prob
    drop_audio = (r_audio < audio_drop_prob) | drop_both
    drop = drop_audio.astype(jnp.int32).reshape(1)
    # TODO(synk): drop_text only affects the real UNetT text embedding path.

    # ---- lane/sublane-friendly packing (layout plumbing only, no compute) ----
    Dp = pl.cdiv(D, 128) * 128                   # lane-dense last dim
    M = B * N
    TM = min(tile_m, pl.cdiv(M, 8) * 8)          # rows per grid step
    TM = pl.cdiv(TM, 8) * 8
    Mp = pl.cdiv(M, TM) * TM
    G = Mp // TM

    def pad2(x, rows, cols, cval=0):
        return jnp.pad(x, ((0, rows - x.shape[0]), (0, cols - x.shape[1])),
                       constant_values=cval)

    x1_2d = pad2(feats.reshape(M, D), Mp, Dp)
    x0_2d = pad2(x0.reshape(M, D), Mp, Dp)

    t_row = pad2(jnp.repeat(time, N)[:, None].astype(jnp.float32), Mp, 1)
    seq_row = pad2(jnp.tile(jnp.arange(N, dtype=jnp.int32), B)[:, None],
                   Mp, 1, cval=-1)               # padded rows never in span
    start_row = pad2(jnp.repeat(start.astype(jnp.int32), N)[:, None], Mp, 1)
    end_row = pad2(jnp.repeat(end.astype(jnp.int32), N)[:, None], Mp, 1)

    # fused weight: [Wp; Wc]  (2*Dp, Dp), zero-padded
    w_stacked = jnp.concatenate([pad2(wp, Dp, Dp), pad2(wc, Dp, Dp)], axis=0)
    bias_p = pad2(bias, 1, Dp)

    # advisory cost estimate for XLA scheduling
    cost = pl.CostEstimate(
        flops=int(2 * Mp * (2 * Dp) * Dp),
        transcendentals=int(Mp * Dp),
        bytes_accessed=int(4 * Mp * Dp * 4 + w_stacked.size * 4 + bias_p.size * 4),
    )

    grid_spec = pltpu.PrefetchScalarGridSpec(
        num_scalar_prefetch=1,                   # drop flag -> SMEM
        grid=(G,),
        in_specs=[
            pl.BlockSpec((TM, Dp), lambda i, *_: (i, 0)),      # x1 (feats)
            pl.BlockSpec((TM, Dp), lambda i, *_: (i, 0)),      # x0 (noise)
            pl.BlockSpec((TM, 1), lambda i, *_: (i, 0)),       # t per row
            pl.BlockSpec((TM, 1), lambda i, *_: (i, 0)),       # seq idx per row
            pl.BlockSpec((TM, 1), lambda i, *_: (i, 0)),       # span start per row
            pl.BlockSpec((TM, 1), lambda i, *_: (i, 0)),       # span end per row
            pl.BlockSpec((2 * Dp, Dp), lambda i, *_: (0, 0)),  # W stacked
            pl.BlockSpec((1, Dp), lambda i, *_: (0, 0)),       # bias
        ],
        out_specs=[
            pl.BlockSpec((TM, Dp), lambda i, *_: (i, 0)),            # cond
            pl.BlockSpec((TM, Dp), lambda i, *_: (i, 0)),            # pred
            pl.BlockSpec((None, 8, 128), lambda i, *_: (i, 0, 0)),   # loss partials
            pl.BlockSpec((None, 8, 128), lambda i, *_: (i, 0, 0)),   # count partials
        ],
    )

    cond_p, pred_p, loss_part, cnt_part = pl.pallas_call(
        functools.partial(_e2tts_kernel, d_true=D),
        out_shape=(
            jax.ShapeDtypeStruct((Mp, Dp), feats.dtype),
            jax.ShapeDtypeStruct((Mp, Dp), feats.dtype),
            jax.ShapeDtypeStruct((G, 8, 128), jnp.float32),
            jax.ShapeDtypeStruct((G, 8, 128), jnp.float32),
        ),
        grid_spec=grid_spec,
        compiler_params=pltpu.CompilerParams(
            dimension_semantics=("parallel",)),  # per-tile partials -> no accum dep
        cost_estimate=cost,
    )(drop, x1_2d, x0_2d, t_row, seq_row, start_row, end_row, w_stacked, bias_p)

    # strip padding back to (B, N, D)
    cond = cond_p[:M, :D].reshape(B, N, D)
    pred = pred_p[:M, :D].reshape(B, N, D)

    loss_sum = jnp.sum(loss_part[:, 0, 0])
    cnt = jnp.sum(cnt_part[:, 0, 0])
    loss = loss_sum / jnp.maximum(cnt, 1.0)      # guard empty-span edge case
    return loss, cond, pred


def init_params(key, odim):
    k1, k2 = jax.random.split(key)
    wp = jax.random.normal(k1, (odim, odim), dtype=jnp.float32) * 0.1
    wc = jax.random.normal(k2, (odim, odim), dtype=jnp.float32) * 0.1
    bias = jnp.zeros((1, odim), dtype=jnp.float32)
    return wp, wc, bias


if __name__ == "__main__":
    B, N, D = 2, 16, 32          # batch, mel frames, mel dim (odim)
    idim = 16                    # text vocab size
    text_len = 8

    root = jax.random.PRNGKey(0)
    k_feats, k_text, k_params, k_fwd = jax.random.split(root, 4)

    feats = jax.random.normal(k_feats, (B, N, D), dtype=jnp.float32)
    feats_lengths = jnp.array([N, N - 4], dtype=jnp.int32)
    text = jax.random.randint(k_text, (B, text_len), 0, idim, dtype=jnp.int32)

    params = init_params(k_params, D)

    loss, cond, pred = e2tts_forward(text, feats, feats_lengths, params, k_fwd)
    jax.block_until_ready((loss, cond, pred))

    assert cond.shape == (B, N, D) and pred.shape == (B, N, D)
    assert jnp.isfinite(loss)
    print("KERNEL_OK")
</pallas_src>

<mosaic_0001>
module attributes {stable_mosaic.version = 11 : i64} {
  func.func @_e2tts_kernel(%arg0: i32, %arg1: memref<1xi32, #tpu.memory_space<smem>>, %arg2: memref<32x128xf32, #tpu.memory_space<vmem>>, %arg3: memref<32x128xf32, #tpu.memory_space<vmem>>, %arg4: memref<32x1xf32, #tpu.memory_space<vmem>>, %arg5: memref<32x1xi32, #tpu.memory_space<vmem>>, %arg6: memref<32x1xi32, #tpu.memory_space<vmem>>, %arg7: memref<32x1xi32, #tpu.memory_space<vmem>>, %arg8: memref<256x128xf32, #tpu.memory_space<vmem>>, %arg9: memref<1x128xf32, #tpu.memory_space<vmem>>, %arg10: memref<32x128xf32, #tpu.memory_space<vmem>>, %arg11: memref<32x128xf32, #tpu.memory_space<vmem>>, %arg12: memref<1x8x128xf32, #tpu.memory_space<vmem>>, %arg13: memref<1x8x128xf32, #tpu.memory_space<vmem>>) attributes {dimension_semantics = [#tpu.dimension_semantics<parallel>], iteration_bounds = array<i64: 1>, scalar_prefetch = 1 : i64, scratch_operands = 0 : i64, tpu.core_type = #tpu.core_type<tc>, window_params = [{transform_indices = @transform_0, window_bounds = array<i64: 32, 128>}, {transform_indices = @transform_1, window_bounds = array<i64: 32, 128>}, {transform_indices = @transform_2, window_bounds = array<i64: 32, 1>}, {transform_indices = @transform_3, window_bounds = array<i64: 32, 1>}, {transform_indices = @transform_4, window_bounds = array<i64: 32, 1>}, {transform_indices = @transform_5, window_bounds = array<i64: 32, 1>}, {pipeline_mode = #tpu.pipeline_mode<synchronous>, transform_indices = @transform_6, window_bounds = array<i64: 256, 128>}, {pipeline_mode = #tpu.pipeline_mode<synchronous>, transform_indices = @transform_7, window_bounds = array<i64: 1, 128>}, {transform_indices = @transform_8, window_bounds = array<i64: 32, 128>}, {transform_indices = @transform_9, window_bounds = array<i64: 32, 128>}, {transform_indices = @transform_10, window_bounds = array<i64: 1, 8, 128>}, {transform_indices = @transform_11, window_bounds = array<i64: 1, 8, 128>}]} {
    %c0 = arith.constant 0 : index
    %c0_0 = arith.constant 0 : index
    %0 = vector.load %arg2[%c0, %c0_0] : memref<32x128xf32, #tpu.memory_space<vmem>>, vector<32x128xf32>
    %c0_1 = arith.constant 0 : index
    %c0_2 = arith.constant 0 : index
    %1 = vector.load %arg3[%c0_1, %c0_2] : memref<32x128xf32, #tpu.memory_space<vmem>>, vector<32x128xf32>
    %c0_3 = arith.constant 0 : index
    %c0_4 = arith.constant 0 : index
    %2 = vector.load %arg4[%c0_3, %c0_4] : memref<32x1xf32, #tpu.memory_space<vmem>>, vector<32x1xf32>
    %cst = arith.constant 1.000000e+00 : f32
    %3 = vector.broadcast %cst : f32 to vector<32x1xf32>
    %4 = arith.subf %3, %2 : vector<32x1xf32>
    %5 = vector.broadcast %4 : vector<32x1xf32> to vector<32x128xf32>
    %6 = arith.mulf %5, %1 : vector<32x128xf32>
    %7 = vector.broadcast %2 : vector<32x1xf32> to vector<32x128xf32>
    %8 = arith.mulf %7, %0 : vector<32x128xf32>
    %9 = arith.addf %6, %8 : vector<32x128xf32>
    %10 = arith.subf %0, %1 : vector<32x128xf32>
    %c0_5 = arith.constant 0 : index
    %c0_6 = arith.constant 0 : index
    %11 = vector.load %arg5[%c0_5, %c0_6] : memref<32x1xi32, #tpu.memory_space<vmem>>, vector<32x1xi32>
    %c0_7 = arith.constant 0 : index
    %c0_8 = arith.constant 0 : index
    %12 = vector.load %arg6[%c0_7, %c0_8] : memref<32x1xi32, #tpu.memory_space<vmem>>, vector<32x1xi32>
    %13 = arith.cmpi sge, %11, %12 : vector<32x1xi32>
    %c0_9 = arith.constant 0 : index
    %c0_10 = arith.constant 0 : index
    %14 = vector.load %arg7[%c0_9, %c0_10] : memref<32x1xi32, #tpu.memory_space<vmem>>, vector<32x1xi32>
    %15 = arith.cmpi slt, %11, %14 : vector<32x1xi32>
    %16 = arith.andi %13, %15 : vector<32x1xi1>
    %cst_11 = arith.constant 0.000000e+00 : f32
    %17 = vector.broadcast %cst_11 : f32 to vector<32x128xf32>
    %18 = vector.shape_cast %16 : vector<32x1xi1> to vector<32x1xi1>
    %19 = vector.broadcast %18 : vector<32x1xi1> to vector<32x128xi1>
    %20 = arith.select %19, %17, %0 : vector<32x128xi1>, vector<32x128xf32>
    %c0_12 = arith.constant 0 : index
    %c0_13 = arith.constant 0 : index
    %21 = vector.load %arg10[%c0_12, %c0_13] : memref<32x128xf32, #tpu.memory_space<vmem>>, vector<32x128xf32>
    tpu.vector_store %arg10[%c0_12, %c0_13], %20 {strides = array<i32>} : memref<32x128xf32, #tpu.memory_space<vmem>>, vector<32x128xf32>,
    %c0_14 = arith.constant 0 : index
    %22 = memref.load %arg1[%c0_14] : memref<1xi32, #tpu.memory_space<smem>>
    %c1_i32 = arith.constant 1 : i32
    %23 = arith.subi %c1_i32, %22 : i32
    %24 = arith.sitofp %23 : i32 to f32
    %25 = vector.broadcast %24 : f32 to vector<32x128xf32>
    %26 = arith.mulf %20, %25 : vector<32x128xf32>
    %27 = tpu.concatenate %9, %26 in 1 : vector<32x128xf32>, vector<32x128xf32> -> vector<32x256xf32>
    %c0_15 = arith.constant 0 : index
    %c0_16 = arith.constant 0 : index
    %28 = vector.load %arg8[%c0_15, %c0_16] : memref<256x128xf32, #tpu.memory_space<vmem>>, vector<256x128xf32>
    %cst_17 = arith.constant dense<0.000000e+00> : vector<32x128xf32>
    %29 = tpu.matmul %27, %28, %cst_17 {dimension_numbers = #tpu.dot_dimension_numbers<[1], [0], [0], [1], [0, 0, 1, 1], [], []>} : vector<32x256xf32>, vector<256x128xf32>, vector<32x128xf32> -> vector<32x128xf32>
    %c0_18 = arith.constant 0 : index
    %c0_19 = arith.constant 0 : index
    %30 = vector.load %arg9[%c0_18, %c0_19] : memref<1x128xf32, #tpu.memory_space<vmem>>, vector<1x128xf32>
    %31 = vector.broadcast %30 : vector<1x128xf32> to vector<32x128xf32>
    %32 = arith.addf %29, %31 : vector<32x128xf32>
    %33 = vector.broadcast %2 : vector<32x1xf32> to vector<32x128xf32>
    %34 = arith.addf %32, %33 : vector<32x128xf32>
    %35 = math.tanh %34 : vector<32x128xf32>
    %c0_20 = arith.constant 0 : index
    %c0_21 = arith.constant 0 : index
    %36 = vector.load %arg11[%c0_20, %c0_21] : memref<32x128xf32, #tpu.memory_space<vmem>>, vector<32x128xf32>
    tpu.vector_store %arg11[%c0_20, %c0_21], %35 {strides = array<i32>} : memref<32x128xf32, #tpu.memory_space<vmem>>, vector<32x128xf32>,
    %37 = tpu.iota {dimensions = array<i32: 1>} : vector<32x128xi32>
    %c32_i32 = arith.constant 32 : i32
    %38 = vector.broadcast %c32_i32 : i32 to vector<32x128xi32>
    %39 = arith.cmpi slt, %37, %38 : vector<32x128xi32>
    %40 = vector.broadcast %16 : vector<32x1xi1> to vector<32x128xi1>
    %41 = arith.andi %40, %39 : vector<32x128xi1>
    %42 = arith.subf %35, %10 : vector<32x128xf32>
    %43 = arith.subf %35, %10 : vector<32x128xf32>
    %44 = arith.mulf %42, %43 : vector<32x128xf32>
    %cst_22 = arith.constant 0.000000e+00 : f32
    %45 = vector.broadcast %cst_22 : f32 to vector<32x128xf32>
    %46 = arith.select %41, %44, %45 : vector<32x128xi1>, vector<32x128xf32>
    %47 = vector.shape_cast %46 : vector<32x128xf32> to vector<1x32x128xf32>
    %cst_23 = arith.constant dense<0.000000e+00> : vector<1xf32>
    %48 = vector.multi_reduction <add>, %47, %cst_23 [1, 2] : vector<1x32x128xf32> to vector<1xf32>
    %49 = vector.shape_cast %48 : vector<1xf32> to vector<1x1x1xf32>
    %50 = vector.extract %49[0, 0, 0] : f32 from vector<1x1x1xf32>
    %51 = arith.extui %16 : vector<32x1xi1> to vector<32x1xi32>
    %52 = arith.sitofp %51 : vector<32x1xi32> to vector<32x1xf32>
    %53 = vector.shape_cast %52 : vector<32x1xf32> to vector<1x32x1xf32>
    %cst_24 = arith.constant dense<0.000000e+00> : vector<1xf32>
    %54 = vector.multi_reduction <add>, %53, %cst_24 [1, 2] : vector<1x32x1xf32> to vector<1xf32>
    %55 = vector.shape_cast %54 : vector<1xf32> to vector<1x1x1xf32>
    %56 = vector.extract %55[0, 0, 0] : f32 from vector<1x1x1xf32>
    %cst_25 = arith.constant 3.200000e+01 : f32
    %57 = arith.mulf %56, %cst_25 : f32
    %58 = vector.broadcast %50 : f32 to vector<8x128xf32>
    %c0_26 = arith.constant 0 : index
    %c0_27 = arith.constant 0 : index
    %c0_28 = arith.constant 0 : index
    %59 = vector.load %arg12[%c0_26, %c0_27, %c0_28] : memref<1x8x128xf32, #tpu.memory_space<vmem>>, vector<1x8x128xf32>
    %60 = vector.shape_cast %59 : vector<1x8x128xf32> to vector<8x128xf32>
    %61 = vector.shape_cast %58 : vector<8x128xf32> to vector<1x8x128xf32>
    tpu.vector_store %arg12[%c0_26, %c0_27, %c0_28], %61 {strides = array<i32>} : memref<1x8x128xf32, #tpu.memory_space<vmem>>, vector<1x8x128xf32>,
    %62 = vector.broadcast %57 : f32 to vector<8x128xf32>
    %c0_29 = arith.constant 0 : index
    %c0_30 = arith.constant 0 : index
    %c0_31 = arith.constant 0 : index
    %63 = vector.load %arg13[%c0_29, %c0_30, %c0_31] : memref<1x8x128xf32, #tpu.memory_space<vmem>>, vector<1x8x128xf32>
    %64 = vector.shape_cast %63 : vector<1x8x128xf32> to vector<8x128xf32>
    %65 = vector.shape_cast %62 : vector<8x128xf32> to vector<1x8x128xf32>
    tpu.vector_store %arg13[%c0_29, %c0_30, %c0_31], %65 {strides = array<i32>} : memref<1x8x128xf32, #tpu.memory_space<vmem>>, vector<1x8x128xf32>,
    return
  }
  func.func @transform_0(%arg0: i32, %arg1: memref<1xi32, #tpu.memory_space<smem>>) -> (i32, i32) {
    %c0_i32 = arith.constant 0 : i32
    %c0_i32_0 = arith.constant 0 : i32
    return %arg0, %c0_i32 : i32, i32
  }
  func.func @transform_1(%arg0: i32, %arg1: memref<1xi32, #tpu.memory_space<smem>>) -> (i32, i32) {
    %c0_i32 = arith.constant 0 : i32
    %c0_i32_0 = arith.constant 0 : i32
    return %arg0, %c0_i32 : i32, i32
  }
  func.func @transform_2(%arg0: i32, %arg1: memref<1xi32, #tpu.memory_space<smem>>) -> (i32, i32) {
    %c0_i32 = arith.constant 0 : i32
    %c0_i32_0 = arith.constant 0 : i32
    return %arg0, %c0_i32 : i32, i32
  }
  func.func @transform_3(%arg0: i32, %arg1: memref<1xi32, #tpu.memory_space<smem>>) -> (i32, i32) {
    %c0_i32 = arith.constant 0 : i32
    %c0_i32_0 = arith.constant 0 : i32
    return %arg0, %c0_i32 : i32, i32
  }
  func.func @transform_4(%arg0: i32, %arg1: memref<1xi32, #tpu.memory_space<smem>>) -> (i32, i32) {
    %c0_i32 = arith.constant 0 : i32
    %c0_i32_0 = arith.constant 0 : i32
    return %arg0, %c0_i32 : i32, i32
  }
  func.func @transform_5(%arg0: i32, %arg1: memref<1xi32, #tpu.memory_space<smem>>) -> (i32, i32) {
    %c0_i32 = arith.constant 0 : i32
    %c0_i32_0 = arith.constant 0 : i32
    return %arg0, %c0_i32 : i32, i32
  }
  func.func @transform_6(%arg0: i32, %arg1: memref<1xi32, #tpu.memory_space<smem>>) -> (i32, i32) {
    %c0_i32 = arith.constant 0 : i32
    %c0_i32_0 = arith.constant 0 : i32
    %c0_i32_1 = arith.constant 0 : i32
    return %c0_i32, %c0_i32_0 : i32, i32
  }
  func.func @transform_7(%arg0: i32, %arg1: memref<1xi32, #tpu.memory_space<smem>>) -> (i32, i32) {
    %c0_i32 = arith.constant 0 : i32
    %c0_i32_0 = arith.constant 0 : i32
    %c0_i32_1 = arith.constant 0 : i32
    return %c0_i32, %c0_i32_0 : i32, i32
  }
  func.func @transform_8(%arg0: i32, %arg1: memref<1xi32, #tpu.memory_space<smem>>) -> (i32, i32) {
    %c0_i32 = arith.constant 0 : i32
    %c0_i32_0 = arith.constant 0 : i32
    return %arg0, %c0_i32 : i32, i32
  }
  func.func @transform_9(%arg0: i32, %arg1: memref<1xi32, #tpu.memory_space<smem>>) -> (i32, i32) {
    %c0_i32 = arith.constant 0 : i32
    %c0_i32_0 = arith.constant 0 : i32
    return %arg0, %c0_i32 : i32, i32
  }
  func.func @transform_10(%arg0: i32, %arg1: memref<1xi32, #tpu.memory_space<smem>>) -> (i32, i32, i32) {
    %c0_i32 = arith.constant 0 : i32
    %c0_i32_0 = arith.constant 0 : i32
    %c0_i32_1 = arith.constant 0 : i32
    return %arg0, %c0_i32, %c0_i32_0 : i32, i32, i32
  }
  func.func @transform_11(%arg0: i32, %arg1: memref<1xi32, #tpu.memory_space<smem>>) -> (i32, i32, i32) {
    %c0_i32 = arith.constant 0 : i32
    %c0_i32_0 = arith.constant 0 : i32
    %c0_i32_1 = arith.constant 0 : i32
    return %arg0, %c0_i32, %c0_i32_0 : i32, i32, i32
  }
}

</mosaic_0001>

<llo_original>
// kernel: tpu_custom_call.1
$region0: #{tpu_custom_call.1}
  #allocation0 [shape = 'u32[]', space=smem, size = 0x4, offset = 0x4, fixed_abs, tag = 'smem constant byte address 0x4 - core index']
  #allocation1 [shape = 'u32[144,128]{1,0:T(1,128)}', space=vmem, size = 0x12000, scoped, tag = 'internal scratch']
  #allocation2 [shape = 's32[1]{0}', space=sflag, size = 0x4, scoped, tag = 'scoped memory for tpu_custom_call.1']
  #allocation3 [shape = 's32[1]{0:T(128)S(6)}', space=smem, size = 0x200, scoped, tag = 'prefetched SMEM operand 0']
  %s0 = inlined_call_operand.<no memory space> [shape: s32[1], index: 0, kind: input, shape index: {}]
  %s1 = inlined_call_operand.vmem [shape: f32[32,128], index: 1, kind: input, shape index: {}]
  %s2 = inlined_call_operand.vmem [shape: f32[32,128], index: 2, kind: input, shape index: {}]
  %s3 = inlined_call_operand.vmem [shape: f32[32,1], index: 3, kind: input, shape index: {}]
  %s4 = inlined_call_operand.vmem [shape: s32[32,1], index: 4, kind: input, shape index: {}]
  %s5 = inlined_call_operand.vmem [shape: s32[32,1], index: 5, kind: input, shape index: {}]
  %s6 = inlined_call_operand.vmem [shape: s32[32,1], index: 6, kind: input, shape index: {}]
  %s7 = inlined_call_operand.hbm [shape: f32[256,128], index: 7, kind: input, shape index: {}]
  %s8 = inlined_call_operand.vmem [shape: f32[1,128], index: 8, kind: input, shape index: {}]
  %s9 = inlined_call_operand.hbm [shape: f32[32,128], index: 9, kind: output, shape index: {0}]
  %s10 = inlined_call_operand.hbm [shape: f32[32,128], index: 10, kind: output, shape index: {1}]
  %s11 = inlined_call_operand.hbm [shape: f32[1,8,128], index: 11, kind: output, shape index: {2}]
  %s12 = inlined_call_operand.hbm [shape: f32[1,8,128], index: 12, kind: output, shape index: {3}]
  %13 = xla_tuple %s9, %s10, %s11, %s12
  %s14 = sld [smem:[#allocation0]]
  $region70: #{tpu_custom_call.1} parent=0
    _
  %s16 = ssub.s32 1, %s14
  %s17 = scalar_select 0, %s16, %s14
  %18 = sst [smem:[#allocation3]] %s0
  $region1: #{tpu_custom_call.1} parent=0
    #allocation4 [shape = 'u8[131072]{0}', space=vmem, size = 0x20000, scoped, tag = 'input window, operand 7, single buffered']
    #allocation5 [shape = 's32[1]{0}', space=sflag, size = 0x4, scoped, tag = 'scoped memory for tpu_custom_call.1']
    #allocation6 [shape = 's32[1]{0}', space=sflag, size = 0x4, scoped, tag = 'scoped memory for tpu_custom_call.1']
    #allocation7 [shape = 'u8[16384]{0}', space=vmem, size = 0x4000, scoped, tag = 'output window, operand 0, single buffered']
    #allocation8 [shape = 'u8[16384]{0}', space=vmem, size = 0x4000, scoped, tag = 'output window, operand 1, single buffered']
    #allocation9 [shape = 's32[1]{0}', space=sflag, size = 0x4, scoped, tag = 'scoped memory for tpu_custom_call.1']
    #allocation10 [shape = 'u8[4096]{0}', space=vmem, size = 0x1000, scoped, tag = 'output window, operand 2, single buffered']
    #allocation11 [shape = 'u8[4096]{0}', space=vmem, size = 0x1000, scoped, tag = 'output window, operand 3, single buffered']
    #allocation12 [shape = 's32[1]{0}', space=sflag, size = 0x4, scoped, tag = 'scoped memory for tpu_custom_call.1']
    %19 = vsyncpa [#allocation5], 0
    %20 = vsyncpa [#allocation6], 0
    %21 = vsyncpa [#allocation9], 0
    %22 = vsyncpa [#allocation12], 0
    // Predicated region
    $region2: #{tpu_custom_call.1} parent=1 // pred_check
      _
    $region3: #{tpu_custom_call.1} parent=1 // pred_check_branch
      %24 = sbr.rel (0) target = $region5
    $region4: #{tpu_custom_call.1} parent=1 // pred_region
      _
    $region5: #{tpu_custom_call.1} parent=1 // pred_fallthru
      _
    // Predicated region
    $region6: #{tpu_custom_call.1} parent=1 // pred_check
      _
    $region7: #{tpu_custom_call.1} parent=1 // pred_check_branch
      %26 = sbr.rel (0) target = $region9
    $region8: #{tpu_custom_call.1} parent=1 // pred_region
      _
    $region9: #{tpu_custom_call.1} parent=1 // pred_fallthru
      _
    // Predicated region
    $region10: #{tpu_custom_call.1} parent=1 // pred_check
      _
    $region11: #{tpu_custom_call.1} parent=1 // pred_check_branch
      %28 = sbr.rel (0) target = $region13
    $region12: #{tpu_custom_call.1} parent=1 // pred_region
      _
    $region13: #{tpu_custom_call.1} parent=1 // pred_fallthru
      _
    // Predicated region
    $region14: #{tpu_custom_call.1} parent=1 // pred_check
      _
    $region15: #{tpu_custom_call.1} parent=1 // pred_check_branch
      %30 = sbr.rel (0) target = $region17
    $region16: #{tpu_custom_call.1} parent=1 // pred_region
      _
    $region17: #{tpu_custom_call.1} parent=1 // pred_fallthru
      _
    // Predicated region
    $region18: #{tpu_custom_call.1} parent=1 // pred_check
      _
    $region19: #{tpu_custom_call.1} parent=1 // pred_check_branch
      %32 = sbr.rel (0) target = $region21
    $region20: #{tpu_custom_call.1} parent=1 // pred_region
      _
    $region21: #{tpu_custom_call.1} parent=1 // pred_fallthru
      _
    // Predicated region
    $region22: #{tpu_custom_call.1} parent=1 // pred_check
      _
    $region23: #{tpu_custom_call.1} parent=1 // pred_check_branch
      %34 = sbr.rel (0) target = $region25
    $region24: #{tpu_custom_call.1} parent=1 // pred_region
      _
    $region25: #{tpu_custom_call.1} parent=1 // pred_fallthru
      _
    // Predicated region
    $region26: #{tpu_custom_call.1} parent=1 // pred_check
      _
    $region27: #{tpu_custom_call.1} parent=1 // pred_check_branch
      %36 = sbr.rel (0) target = $region29
    $region28: #{tpu_custom_call.1} parent=1 // pred_region
      %s38 = ssub.s32 4096, 4096
      %39 = vsyncadd [#allocation5], %s38
      %s40 = sshll.u32 [#allocation4], 4
      %s41 = int_to_ptr.vmem [resolvable:$true] %s40
      %46 = dma.hbm_to_vmem [thread:$0]  %s7, 4096, %s41, [#allocation5], 128, 128, 8
    $region29: #{tpu_custom_call.1} parent=1 // pred_fallthru
      _
    // Predicated region
    $region30: #{tpu_custom_call.1} parent=1 // pred_check
      _
    $region31: #{tpu_custom_call.1} parent=1 // pred_check_branch
      %48 = sbr.rel (0) target = $region33
    $region32: #{tpu_custom_call.1} parent=1 // pred_region
      _
    $region33: #{tpu_custom_call.1} parent=1 // pred_fallthru
      _
    // Predicated region
    $region34: #{tpu_custom_call.1} parent=1 // pred_check
      _
    $region35: #{tpu_custom_call.1} parent=1 // pred_check_branch
      %50 = sbr.rel (0) target = $region37
    $region36: #{tpu_custom_call.1} parent=1 // pred_region
      %51 = dma.done [#allocation5], 4096
    $region37: #{tpu_custom_call.1} parent=1 // pred_fallthru
      _
    %v52 = vld [vmem:[%s1] sm:$0xff]
    %v53 = vld [vmem:[%s1 + $0x8] sm:$0xff]
    %v54 = vld [vmem:[%s1 + $0x10] sm:$0xff]
    %v55 = vld [vmem:[%s1 + $0x18] sm:$0xff]
    %v56 = vld [vmem:[%s2] sm:$0xff]
    %v57 = vld [vmem:[%s2 + $0x8] sm:$0xff]
    %v58 = vld [vmem:[%s2 + $0x10] sm:$0xff]
    %v59 = vld [vmem:[%s2 + $0x18] sm:$0xff]
    %v60 = vld [vmem:[%s3] sm:$0xff]
    %v61 = vld [vmem:[%s3 + $0x8] sm:$0xff]
    %v62 = vld [vmem:[%s3 + $0x10] sm:$0xff]
    %v63 = vld [vmem:[%s3 + $0x18] sm:$0xff]
    %v64 = vsub.f32 1.0, %v60
    %v65 = vsub.f32 1.0, %v61
    %v66 = vsub.f32 1.0, %v62
    %v67 = vsub.f32 1.0, %v63
    %69 = vset.pattern.permute.xlu0 0
    %70 = vperm.xlu0 %69, %v64
    %v71 = vpop.permute.xlu0 %70
    %74 = vset.pattern.permute.xlu0 0
    %75 = vperm.xlu0 %74, %v65
    %v76 = vpop.permute.xlu0 %75
    %79 = vset.pattern.permute.xlu0 0
    %80 = vperm.xlu0 %79, %v66
    %v81 = vpop.permute.xlu0 %80
    %84 = vset.pattern.permute.xlu0 0
    %85 = vperm.xlu0 %84, %v67
    %v86 = vpop.permute.xlu0 %85
    %v88 = vmul.f32 %v71, %v56
    %v89 = vmul.f32 %v76, %v57
    %v90 = vmul.f32 %v81, %v58
    %v91 = vmul.f32 %v86, %v59
    %93 = vset.pattern.permute.xlu0 0
    %94 = vperm.xlu0 %93, %v60
    %v95 = vpop.permute.xlu0 %94
    %98 = vset.pattern.permute.xlu0 0
    %99 = vperm.xlu0 %98, %v61
    %v100 = vpop.permute.xlu0 %99
    %103 = vset.pattern.permute.xlu0 0
    %104 = vperm.xlu0 %103, %v62
    %v105 = vpop.permute.xlu0 %104
    %108 = vset.pattern.permute.xlu0 0
    %109 = vperm.xlu0 %108, %v63
    %v110 = vpop.permute.xlu0 %109
    %v112 = vmul.f32 %v95, %v52
    %v113 = vmul.f32 %v100, %v53
    %v114 = vmul.f32 %v105, %v54
    %v115 = vmul.f32 %v110, %v55
    %v116 = vadd.f32 %v88, %v112
    %v117 = vadd.f32 %v89, %v113
    %v118 = vadd.f32 %v90, %v114
    %v119 = vadd.f32 %v91, %v115
    %v120 = vsub.f32 %v52, %v56
    %v121 = vsub.f32 %v53, %v57
    %v122 = vsub.f32 %v54, %v58
    %v123 = vsub.f32 %v55, %v59
    %v124 = vld [vmem:[%s4] sm:$0xff]
    %v125 = vld [vmem:[%s4 + $0x8] sm:$0xff]
    %v126 = vld [vmem:[%s4 + $0x10] sm:$0xff]
    %v127 = vld [vmem:[%s4 + $0x18] sm:$0xff]
    %v128 = vld [vmem:[%s5] sm:$0xff]
    %v129 = vld [vmem:[%s5 + $0x8] sm:$0xff]
    %v130 = vld [vmem:[%s5 + $0x10] sm:$0xff]
    %v131 = vld [vmem:[%s5 + $0x18] sm:$0xff]
    %vm132 = vcmp.ge.s32.totalorder %v124, %v128
    %vm133 = vcmp.ge.s32.totalorder %v125, %v129
    %vm134 = vcmp.ge.s32.totalorder %v126, %v130
    %vm135 = vcmp.ge.s32.totalorder %v127, %v131
    %v136 = vld [vmem:[%s6] sm:$0xff]
    %v137 = vld [vmem:[%s6 + $0x8] sm:$0xff]
    %v138 = vld [vmem:[%s6 + $0x10] sm:$0xff]
    %v139 = vld [vmem:[%s6 + $0x18] sm:$0xff]
    %vm140 = vcmp.lt.s32.totalorder %v124, %v136
    %vm141 = vcmp.lt.s32.totalorder %v125, %v137
    %vm142 = vcmp.lt.s32.totalorder %v126, %v138
    %vm143 = vcmp.lt.s32.totalorder %v127, %v139
    %vm144 = vmand %vm132, %vm140
    %vm145 = vmand %vm133, %vm141
    %vm146 = vmand %vm134, %vm142
    %vm147 = vmand %vm135, %vm143
    %v148 = vsel %vm144, 1, 0
    %v149 = vsel %vm145, 1, 0
    %v150 = vsel %vm146, 1, 0
    %v151 = vsel %vm147, 1, 0
    %152 = vset.pattern.permute.xlu0 0
    %153 = vperm.xlu0 %152, %v148
    %v154 = vpop.permute.xlu0 %153
    %155 = vset.pattern.permute.xlu0 0
    %156 = vperm.xlu0 %155, %v149
    %v157 = vpop.permute.xlu0 %156
    %158 = vset.pattern.permute.xlu0 0
    %159 = vperm.xlu0 %158, %v150
    %v160 = vpop.permute.xlu0 %159
    %161 = vset.pattern.permute.xlu0 0
    %162 = vperm.xlu0 %161, %v151
    %v163 = vpop.permute.xlu0 %162
    %vm164 = vcmp.eq.s32.totalorder %v154, 1
    %vm165 = vcmp.eq.s32.totalorder %v157, 1
    %vm166 = vcmp.eq.s32.totalorder %v160, 1
    %vm167 = vcmp.eq.s32.totalorder %v163, 1
    %v168 = vsel %vm164, 0.0, %v52
    %v169 = vsel %vm165, 0.0, %v53
    %v170 = vsel %vm166, 0.0, %v54
    %v171 = vsel %vm167, 0.0, %v55
    %172 = vst [vmem:[#allocation7] sm:$0xff] %v168
    %173 = vst [vmem:[#allocation7 + $0x8] sm:$0xff] %v169
    %174 = vst [vmem:[#allocation7 + $0x10] sm:$0xff] %v170
    %175 = vst [vmem:[#allocation7 + $0x18] sm:$0xff] %v171
    %s176 = sld [smem:[#allocation3]]
    %s177 = ssub.s32 1, %s176
    %s178 = scvt.s32.f32 %s177
    %v179 = vstv %s178
    %v180 = vmul.f32 %v168, %v179
    %v181 = vmul.f32 %v169, %v179
    %v182 = vmul.f32 %v170, %v179
    %v183 = vmul.f32 %v171, %v179
    %v184 = vld [vmem:[#allocation4] sm:$0xff]
    %v185 = vld [vmem:[#allocation4 + $0x8] sm:$0xff]
    %v186 = vld [vmem:[#allocation4 + $0x10] sm:$0xff]
    %v187 = vld [vmem:[#allocation4 + $0x18] sm:$0xff]
    %v188 = vld [vmem:[#allocation4 + $0x20] sm:$0xff]
    %v189 = vld [vmem:[#allocation4 + $0x28] sm:$0xff]
    %v190 = vld [vmem:[#allocation4 + $0x30] sm:$0xff]
    %v191 = vld [vmem:[#allocation4 + $0x38] sm:$0xff]
    %v192 = vld [vmem:[#allocation4 + $0x40] sm:$0xff]
    %v193 = vld [vmem:[#allocation4 + $0x48] sm:$0xff]
    %v194 = vld [vmem:[#allocation4 + $0x50] sm:$0xff]
    %v195 = vld [vmem:[#allocation4 + $0x58] sm:$0xff]
    %v196 = vld [vmem:[#allocation4 + $0x60] sm:$0xff]
    %v197 = vld [vmem:[#allocation4 + $0x68] sm:$0xff]
    %v198 = vld [vmem:[#allocation4 + $0x70] sm:$0xff]
    %v199 = vld [vmem:[#allocation4 + $0x78] sm:$0xff]
    %v200 = vld [vmem:[#allocation4 + $0x80] sm:$0xff]
    %v201 = vld [vmem:[#allocation4 + $0x88] sm:$0xff]
    %v202 = vld [vmem:[#allocation4 + $0x90] sm:$0xff]
    %v203 = vld [vmem:[#allocation4 + $0x98] sm:$0xff]
    %v204 = vld [vmem:[#allocation4 + $0xa0] sm:$0xff]
    %v205 = vld [vmem:[#allocation4 + $0xa8] sm:$0xff]
    %v206 = vld [vmem:[#allocation4 + $0xb0] sm:$0xff]
    %v207 = vld [vmem:[#allocation4 + $0xb8] sm:$0xff]
    %v208 = vld [vmem:[#allocation4 + $0xc0] sm:$0xff]
    %v209 = vld [vmem:[#allocation4 + $0xc8] sm:$0xff]
    %v210 = vld [vmem:[#allocation4 + $0xd0] sm:$0xff]
    %v211 = vld [vmem:[#allocation4 + $0xd8] sm:$0xff]
    %v212 = vld [vmem:[#allocation4 + $0xe0] sm:$0xff]
    %v213 = vld [vmem:[#allocation4 + $0xe8] sm:$0xff]
    %v214 = vld [vmem:[#allocation4 + $0xf0] sm:$0xff]
    %v215 = vld [vmem:[#allocation4 + $0xf8] sm:$0xff]
    %v216 = vld [vmem:[%s8] sm:$0x1]
    %v218 = vlaneseq
    %v219 = vshrl.u32 %v218, 7
    %v220 = vsub.s32 0, %v219
    %v221 = vrot.slane %v216, %v220
    %223 = vmatprep.subr.mxu0 0.0
    %224 = vmatpush1.msra.mxu0 %v199
    %225 = vmatprep.subr.mxu0 0.0
    %226 = vmatpush1.msra.mxu0 %v198
    %227 = vmatprep.subr.mxu0 0.0
    %228 = vmatpush1.msra.mxu0 %v197
    %229 = vmatprep.subr.mxu0 0.0
    %230 = vmatpush1.msra.mxu0 %v196
    %231 = vmatprep.subr.mxu0 0.0
    %232 = vmatpush1.msra.mxu0 %v195
    %233 = vmatprep.subr.mxu0 0.0
    %234 = vmatpush1.msra.mxu0 %v194
    %235 = vmatprep.subr.mxu0 0.0
    %236 = vmatpush1.msra.mxu0 %v193
    %237 = vmatprep.subr.mxu0 0.0
    %238 = vmatpush1.msra.mxu0 %v192
    %239 = vmatprep.subr.mxu0 0.0
    %240 = vmatpush1.msra.mxu0 %v191
    %241 = vmatprep.subr.mxu0 0.0
    %242 = vmatpush1.msra.mxu0 %v190
    %243 = vmatprep.subr.mxu0 0.0
    %244 = vmatpush1.msra.mxu0 %v189
    %245 = vmatprep.subr.mxu0 0.0
    %246 = vmatpush1.msra.mxu0 %v188
    %247 = vmatprep.subr.mxu0 0.0
    %248 = vmatpush1.msra.mxu0 %v187
    %249 = vmatprep.subr.mxu0 0.0
    %250 = vmatpush1.msra.mxu0 %v186
    %251 = vmatprep.subr.mxu0 0.0
    %252 = vmatpush1.msra.mxu0 %v185
    %253 = vmatprep.subr.mxu0 0.0
    %254 = vmatpush1.msra.mxu0 %v184
    %255 = vmatprep.subr.mxu0 0.0
    %256 = vmatpush2.msra.mxu0 %v215
    %257 = vmatprep.subr.mxu0 0.0
    %258 = vmatpush2.msra.mxu0 %v214
    %259 = vmatprep.subr.mxu0 0.0
    %260 = vmatpush2.msra.mxu0 %v213
    %261 = vmatprep.subr.mxu0 0.0
    %262 = vmatpush2.msra.mxu0 %v212
    %263 = vmatprep.subr.mxu0 0.0
    %264 = vmatpush2.msra.mxu0 %v211
    %265 = vmatprep.subr.mxu0 0.0
    %266 = vmatpush2.msra.mxu0 %v210
    %267 = vmatprep.subr.mxu0 0.0
    %268 = vmatpush2.msra.mxu0 %v209
    %269 = vmatprep.subr.mxu0 0.0
    %270 = vmatpush2.msra.mxu0 %v208
    %271 = vmatprep.subr.mxu0 0.0
    %272 = vmatpush2.msra.mxu0 %v207
    %273 = vmatprep.subr.mxu0 0.0
    %274 = vmatpush2.msra.mxu0 %v206
    %275 = vmatprep.subr.mxu0 0.0
    %276 = vmatpush2.msra.mxu0 %v205
    %277 = vmatprep.subr.mxu0 0.0
    %278 = vmatpush2.msra.mxu0 %v204
    %279 = vmatprep.subr.mxu0 0.0
    %280 = vmatpush2.msra.mxu0 %v203
    %281 = vmatprep.subr.mxu0 0.0
    %282 = vmatpush2.msra.mxu0 %v202
    %283 = vmatprep.subr.mxu0 0.0
    %284 = vmatpush2.msra.mxu0 %v201
    %285 = vmatprep.subr.mxu0 0.0
    %286 = vmatpush2.msra.mxu0 %v200
    %287 = vmatprep.mubr.f32.mxu0 %v180
    %288 = vmatmul.mubr.f32.gmra.mxu0 %v116
    %v289 = vpop.f32.mrf.mxu0
    %v290 = vadd.f32 %v221, %v289
    %v291 = vpop.f32.mrf.mxu0
    %292 = vmatprep.mubr.f32.mxu0 %v181
    %293 = vmatmul.mubr.f32.gmra.mxu0 %v117
    %v294 = vpop.f32.mrf.mxu0
    %v295 = vadd.f32 %v221, %v294
    %v296 = vpop.f32.mrf.mxu0
    %297 = vmatprep.mubr.f32.mxu0 %v182
    %298 = vmatmul.mubr.f32.gmra.mxu0 %v118
    %v299 = vpop.f32.mrf.mxu0
    %v300 = vadd.f32 %v221, %v299
    %v301 = vpop.f32.mrf.mxu0
    %302 = vmatprep.mubr.f32.mxu0 %v183
    %303 = vmatmul.mubr.f32.gmra.mxu0 %v119
    %v304 = vpop.f32.mrf.mxu0
    %v305 = vadd.f32 %v221, %v304
    %v306 = vpop.f32.mrf.mxu0
    %307 = vdwg.mxu0
    %v308 = vadd.f32 %v290, %v95
    %v309 = vadd.f32 %v295, %v100
    %v310 = vadd.f32 %v300, %v105
    %v311 = vadd.f32 %v305, %v110
    %v312 = vtanh.pop %v308
    %v313 = vtanh.pop %v309
    %v314 = vtanh.pop %v310
    %v315 = vtanh.pop %v311
    %316 = vst [vmem:[#allocation8] sm:$0xff] %v312
    %317 = vst [vmem:[#allocation8 + $0x8] sm:$0xff] %v313
    %318 = vst [vmem:[#allocation8 + $0x10] sm:$0xff] %v314
    %319 = vst [vmem:[#allocation8 + $0x18] sm:$0xff] %v315
    %v320 = vlaneseq
    %v321 = vand.u32 %v320, 127
    %vm322 = vcmp.lt.s32.totalorder %v321, 32
    %vm323 = vmand %vm164, %vm322
    %vm324 = vmand %vm165, %vm322
    %vm325 = vmand %vm166, %vm322
    %vm326 = vmand %vm167, %vm322
    %v327 = vsub.f32 %v312, %v120
    %v328 = vsub.f32 %v313, %v121
    %v329 = vsub.f32 %v314, %v122
    %v330 = vsub.f32 %v315, %v123
    %v331 = vmul.f32 %v327, %v327
    %v332 = vmul.f32 %v328, %v328
    %v333 = vmul.f32 %v329, %v329
    %v334 = vmul.f32 %v330, %v330
    %v335 = vsel %vm323, %v331, 0.0
    %v336 = vsel %vm324, %v332, 0.0
    %v337 = vsel %vm325, %v333, 0.0
    %v338 = vsel %vm326, %v334, 0.0
    %v339 = vadd.f32 %v335, %v336
    %v340 = vadd.f32 %v339, %v337
    %v341 = vadd.f32 %v340, %v338
    %342 = vadd.xlane.f32.xlu0 %v341
    %v343 = vpop.xlane.xlu0 %342
    %v344 = vrot.slane %v343, 4
    %v345 = vadd.f32 %v343, %v344
    %v346 = vrot.slane %v345, 2
    %v347 = vadd.f32 %v345, %v346
    %v348 = vrot.slane %v347, 1
    %v349 = vadd.f32 %v347, %v348
    %s350 = vtos %v349
    %v351 = vcvt.s32.f32 %v148
    %v352 = vcvt.s32.f32 %v149
    %v353 = vcvt.s32.f32 %v150
    %v354 = vcvt.s32.f32 %v151
    %vm355 = vcmask 7168
    %v356 = vsel %vm355, %v351, 0.0
    %v357 = vsel %vm355, %v352, 0.0
    %v358 = vadd.f32 %v356, %v357
    %v359 = vsel %vm355, %v353, 0.0
    %v360 = vadd.f32 %v358, %v359
    %v361 = vsel %vm355, %v354, 0.0
    %v362 = vadd.f32 %v360, %v361
    %363 = vadd.xlane.f32.xlu0 %v362
    %v364 = vpop.xlane.xlu0 %363
    %v365 = vrot.slane %v364, 4
    %v366 = vadd.f32 %v364, %v365
    %v367 = vrot.slane %v366, 2
    %v368 = vadd.f32 %v366, %v367
    %v369 = vrot.slane %v368, 1
    %v370 = vadd.f32 %v368, %v369
    %s371 = vtos %v370
    %s372 = smul.f32 %s371, 32.0
    %v373 = vstv %s350
    %374 = vst [vmem:[#allocation10] sm:$0xff] %v373
    %v375 = vstv %s372
    %376 = vst [vmem:[#allocation11] sm:$0xff] %v375
    // Predicated region
    $region38: #{tpu_custom_call.1} parent=1 // pred_check
      _
    $region39: #{tpu_custom_call.1} parent=1 // pred_check_branch
      %378 = sbr.rel (0) target = $region41
    $region40: #{tpu_custom_call.1} parent=1 // pred_region
      %s380 = ssub.s32 512, 512
      %381 = vsyncadd [#allocation6], %s380
      %s382 = sshll.u32 [#allocation7], 4
      %s383 = int_to_ptr.vmem [resolvable:$true] %s382
      %388 = dma.vmem_to_hbm [thread:$0]  %s383, 512, %s9, [#allocation6], 128, 128, 8
    $region41: #{tpu_custom_call.1} parent=1 // pred_fallthru
      _
    // Predicated region
    $region42: #{tpu_custom_call.1} parent=1 // pred_check
      _
    $region43: #{tpu_custom_call.1} parent=1 // pred_check_branch
      %390 = sbr.rel (0) target = $region45
    $region44: #{tpu_custom_call.1} parent=1 // pred_region
      %s392 = ssub.s32 512, 512
      %393 = vsyncadd [#allocation9], %s392
      %s394 = sshll.u32 [#allocation8], 4
      %s395 = int_to_ptr.vmem [resolvable:$true] %s394
      %400 = dma.vmem_to_hbm [thread:$0]  %s395, 512, %s10, [#allocation9], 128, 128, 8
    $region45: #{tpu_custom_call.1} parent=1 // pred_fallthru
      _
    // Predicated region
    $region46: #{tpu_custom_call.1} parent=1 // pred_check
      _
    $region47: #{tpu_custom_call.1} parent=1 // pred_check_branch
      %402 = sbr.rel (0) target = $region49
    $region48: #{tpu_custom_call.1} parent=1 // pred_region
      %s404 = ssub.s32 128, 128
      %405 = vsyncadd [#allocation9], %s404
      %s407 = sshll.u32 [#allocation10], 4
      %s408 = int_to_ptr.vmem [resolvable:$true] %s407
      %410 = dma.vmem_to_hbm [thread:$0]  %s408, 128, %s11, [#allocation9]
    $region49: #{tpu_custom_call.1} parent=1 // pred_fallthru
      _
    // Predicated region
    $region50: #{tpu_custom_call.1} parent=1 // pred_check
      _
    $region51: #{tpu_custom_call.1} parent=1 // pred_check_branch
      %412 = sbr.rel (0) target = $region53
    $region52: #{tpu_custom_call.1} parent=1 // pred_region
      %s414 = ssub.s32 128, 128
      %415 = vsyncadd [#allocation12], %s414
      %s417 = sshll.u32 [#allocation11], 4
      %s418 = int_to_ptr.vmem [resolvable:$true] %s417
      %420 = dma.vmem_to_hbm [thread:$0]  %s418, 128, %s12, [#allocation12]
    $region53: #{tpu_custom_call.1} parent=1 // pred_fallthru
      _
    // Predicated region
    $region54: #{tpu_custom_call.1} parent=1 // pred_check
      _
    $region55: #{tpu_custom_call.1} parent=1 // pred_check_branch
      %422 = sbr.rel (0) target = $region57
    $region56: #{tpu_custom_call.1} parent=1 // pred_region
      %423 = dma.done [#allocation6], 512
    $region57: #{tpu_custom_call.1} parent=1 // pred_fallthru
      _
    // Predicated region
    $region58: #{tpu_custom_call.1} parent=1 // pred_check
      _
    $region59: #{tpu_custom_call.1} parent=1 // pred_check_branch
      %425 = sbr.rel (0) target = $region61
    $region60: #{tpu_custom_call.1} parent=1 // pred_region
      %426 = dma.done [#allocation9], 512
    $region61: #{tpu_custom_call.1} parent=1 // pred_fallthru
      _
    // Predicated region
    $region62: #{tpu_custom_call.1} parent=1 // pred_check
      _
    $region63: #{tpu_custom_call.1} parent=1 // pred_check_branch
      %428 = sbr.rel (0) target = $region65
    $region64: #{tpu_custom_call.1} parent=1 // pred_region
      %429 = dma.done [#allocation9], 128
    $region65: #{tpu_custom_call.1} parent=1 // pred_fallthru
      _
    // Predicated region
    $region66: #{tpu_custom_call.1} parent=1 // pred_check
      _
    $region67: #{tpu_custom_call.1} parent=1 // pred_check_branch
      %431 = sbr.rel (0) target = $region69
    $region68: #{tpu_custom_call.1} parent=1 // pred_region
      %432 = dma.done [#allocation12], 128
    $region69: #{tpu_custom_call.1} parent=1 // pred_fallthru
      _
    %433 = vsyncpa [#allocation5], 1
    %434 = vsyncpa [#allocation6], 1
    %435 = vsyncpa [#allocation9], 1
    %436 = vsyncpa [#allocation12], 1

</llo_original>
